<compile_context>
chip_gen: v7x
topology: tpu7x:2x2x1
jax: 0.10.0
libtpu: 0.0.40
codegen_flags: <defaults>
</compile_context>

<pallas_src>
import jax
import jax.numpy as jnp
from jax.experimental import pallas as pl
from jax.experimental.pallas import tpu as pltpu

NUM_FTRS_RESNET = 2048          # resnet50.fc.in_features
_TILE_CAP_4BYTE = 512           # f32 features: 2 inputs x 2 bufs x 4 MiB = 16 MiB
_TILE_CAP_2BYTE = 1024          # bf16 features: same 16 MiB footprint at 2x rows
_VMEM_LIMIT_BYTES = 48 << 20    # > v5e 16 MiB scoped default, < v7x 64 MiB physical


def siamese_fc_kernel(x1_ref, x2_ref, w1_ref, w2_ref, b_ref, o_ref):
    """Linear(2F -> 1) over the implicit concat of (x1, x2), without materializing it.

    x1_ref, x2_ref : (TB, F)  VMEM  feature tiles (any float dtype; upcast to f32)
    w1_ref, w2_ref : (1, F)   VMEM  f32 halves of the nn.Linear weight row
    b_ref          : (1, 1)   SMEM  bias scalar
    o_ref          : (TB, 1)  VMEM  f32 logits
    """
    x1 = x1_ref[...].astype(jnp.float32)            # (TB, F)
    x2 = x2_ref[...].astype(jnp.float32)            # (TB, F)
    w1 = w1_ref[...]                                # (1, F) broadcasts over rows
    w2 = w2_ref[...]

    # cat((x1, x2), 1) @ W^T  ==  sum(x1*w1 + x2*w2, axis=-1)
    acc = x1 * w1 + x2 * w2                         # VPU elementwise
    y = jnp.sum(acc, axis=-1, keepdims=True)        # XLU lane reduce -> (TB, 1)
    o_ref[...] = y + b_ref[0, 0]


def prepare_params(w, b):
    """One-time repack of the PyTorch Linear params (call at param-load time).

    w: (1, 2F) PyTorch-layout weight; b: (1,) bias.
    Returns (w1, w2, b2) = ((1, F), (1, F), (1, 1)) float32.
    """
    two_f = w.shape[1]
    f = two_f // 2
    w1 = w[:, :f].astype(jnp.float32)
    w2 = w[:, f:].astype(jnp.float32)
    b2 = jnp.asarray(b, jnp.float32).reshape(1, 1)
    return w1, w2, b2


def _plan_tiles(batch, itemsize):
    """Pick (batch_tile, padded_batch, grid_len).

    - B <= 8: single full-batch block (block dim == array dim, no padding).
    - Otherwise: tile <= cap (512 f32 / 1024 bf16) and <= ~B/2 (rounded down to a
      multiple of 8) so the grid has >= 2 parallel steps (v7x megacore + pipelining);
      B is padded up to a multiple of the tile.
    """
    if batch <= 8:
        return batch, batch, 1
    cap = _TILE_CAP_2BYTE if itemsize <= 2 else _TILE_CAP_4BYTE
    tb = min(cap, max(8, ((batch // 2) // 8) * 8))
    grid_len = pl.cdiv(batch, tb)
    padded = grid_len * tb
    return tb, padded, grid_len


def siamese_forward(x1, x2, w1, w2, b2):
    """x1, x2: (B, F) features (f32 or bf16); w1, w2: (1, F) f32; b2: (1, 1) f32."""
    B, F = x1.shape
    assert x2.shape == (B, F) and x1.dtype == x2.dtype
    assert w1.shape == (1, F) and w2.shape == (1, F) and b2.shape == (1, 1)

    tb, padded_B, grid_len = _plan_tiles(B, jnp.dtype(x1.dtype).itemsize)
    if padded_B != B:
        pad = padded_B - B
        x1 = jnp.pad(x1, ((0, pad), (0, 0)))
        x2 = jnp.pad(x2, ((0, pad), (0, 0)))

    out = pl.pallas_call(
        siamese_fc_kernel,
        out_shape=jax.ShapeDtypeStruct((padded_B, 1), jnp.float32),
        grid=(grid_len,),
        in_specs=[
            pl.BlockSpec((tb, F), lambda i: (i, 0)),             # x1 batch tile
            pl.BlockSpec((tb, F), lambda i: (i, 0)),             # x2 batch tile
            pl.BlockSpec((1, F), lambda i: (0, 0)),              # W half 1 (resident)
            pl.BlockSpec((1, F), lambda i: (0, 0)),              # W half 2 (resident)
            pl.BlockSpec(memory_space=pltpu.MemorySpace.SMEM),   # bias scalar
        ],
        out_specs=pl.BlockSpec((tb, 1), lambda i: (i, 0)),
        compiler_params=pltpu.CompilerParams(
            dimension_semantics=("parallel",),
            vmem_limit_bytes=_VMEM_LIMIT_BYTES,
        ),
    )(x1, x2, w1, w2, b2)

    return out[:B] if padded_B != B else out


if __name__ == "__main__":
    key = jax.random.PRNGKey(0)
    k_x1, k_x2, k_w, k_b, k_y1, k_y2 = jax.random.split(key, 6)

    F = NUM_FTRS_RESNET  # 2048, implied by resnet50.fc.in_features

    # Deterministic nn.Linear(2F, 1) parameter init (PyTorch-style uniform bound).
    bound = 1.0 / float(jnp.sqrt(jnp.float32(2 * F)))
    w = jax.random.uniform(k_w, (1, 2 * F), dtype=jnp.float32, minval=-bound, maxval=bound)
    b = jax.random.uniform(k_b, (1,), dtype=jnp.float32, minval=-bound, maxval=bound)

    # One-time parameter repack (outside the per-call hot path).
    w1, w2, b2 = prepare_params(w, b)

    # --- Case 1: tiny batch (B=2), f32 features — exact match to the PyTorch module.
    B = 2
    x1 = jax.random.normal(k_x1, (B, F), dtype=jnp.float32)
    x2 = jax.random.normal(k_x2, (B, F), dtype=jnp.float32)
    out = jax.block_until_ready(siamese_forward(x1, x2, w1, w2, b2))
    ref = jnp.concatenate([x1, x2], axis=1) @ w.T + b
    assert out.shape == (B, 1)
    assert jnp.allclose(out, ref, atol=1e-3, rtol=1e-3), (out, ref)

    # --- Case 2: bf16 features (half the HBM traffic; kernel upcasts in-register).
    out_bf16 = jax.block_until_ready(
        siamese_forward(x1.astype(jnp.bfloat16), x2.astype(jnp.bfloat16), w1, w2, b2))
    assert out_bf16.shape == (B, 1)
    assert jnp.allclose(out_bf16, ref, atol=5e-2, rtol=5e-2), (out_bf16, ref)

    # --- Case 3: ragged batch (B=40) — exercises wrapper padding + multi-step grid.
    Bl = 40
    y1 = jax.random.normal(k_y1, (Bl, F), dtype=jnp.float32)
    y2 = jax.random.normal(k_y2, (Bl, F), dtype=jnp.float32)
    out_l = jax.block_until_ready(siamese_forward(y1, y2, w1, w2, b2))
    ref_l = jnp.concatenate([y1, y2], axis=1) @ w.T + b
    assert out_l.shape == (Bl, 1)
    assert jnp.allclose(out_l, ref_l, atol=1e-3, rtol=1e-3), (out_l, ref_l)

    print("KERNEL_OK")
</pallas_src>

<mosaic_0001>
module attributes {stable_mosaic.version = 11 : i64} {
  func.func @siamese_fc_kernel(%arg0: i32, %arg1: memref<2x2048xf32, #tpu.memory_space<vmem>>, %arg2: memref<2x2048xf32, #tpu.memory_space<vmem>>, %arg3: memref<1x2048xf32, #tpu.memory_space<vmem>>, %arg4: memref<1x2048xf32, #tpu.memory_space<vmem>>, %arg5: memref<1x1xf32, #tpu.memory_space<smem>>, %arg6: memref<2x1xf32, #tpu.memory_space<vmem>>) attributes {dimension_semantics = [#tpu.dimension_semantics<parallel>], iteration_bounds = array<i64: 1>, scalar_prefetch = 0 : i64, scratch_operands = 0 : i64, tpu.core_type = #tpu.core_type<tc>, window_params = [{transform_indices = @transform_0, window_bounds = array<i64: 2, 2048>}, {transform_indices = @transform_1, window_bounds = array<i64: 2, 2048>}, {pipeline_mode = #tpu.pipeline_mode<synchronous>, transform_indices = @transform_2, window_bounds = array<i64: 1, 2048>}, {pipeline_mode = #tpu.pipeline_mode<synchronous>, transform_indices = @transform_3, window_bounds = array<i64: 1, 2048>}, {transform_indices = @transform_4, window_bounds = array<i64: 1, 1>}, {transform_indices = @transform_5, window_bounds = array<i64: 2, 1>}]} {
    %c0 = arith.constant 0 : index
    %c0_0 = arith.constant 0 : index
    %0 = vector.load %arg1[%c0, %c0_0] : memref<2x2048xf32, #tpu.memory_space<vmem>>, vector<2x2048xf32>
    %c0_1 = arith.constant 0 : index
    %c0_2 = arith.constant 0 : index
    %1 = vector.load %arg2[%c0_1, %c0_2] : memref<2x2048xf32, #tpu.memory_space<vmem>>, vector<2x2048xf32>
    %c0_3 = arith.constant 0 : index
    %c0_4 = arith.constant 0 : index
    %2 = vector.load %arg3[%c0_3, %c0_4] : memref<1x2048xf32, #tpu.memory_space<vmem>>, vector<1x2048xf32>
    %c0_5 = arith.constant 0 : index
    %c0_6 = arith.constant 0 : index
    %3 = vector.load %arg4[%c0_5, %c0_6] : memref<1x2048xf32, #tpu.memory_space<vmem>>, vector<1x2048xf32>
    %4 = vector.broadcast %2 : vector<1x2048xf32> to vector<2x2048xf32>
    %5 = arith.mulf %0, %4 : vector<2x2048xf32>
    %6 = vector.broadcast %3 : vector<1x2048xf32> to vector<2x2048xf32>
    %7 = arith.mulf %1, %6 : vector<2x2048xf32>
    %8 = arith.addf %5, %7 : vector<2x2048xf32>
    %cst = arith.constant dense<0.000000e+00> : vector<2xf32>
    %9 = vector.multi_reduction <add>, %8, %cst [1] : vector<2x2048xf32> to vector<2xf32>
    %10 = vector.shape_cast %9 : vector<2xf32> to vector<2x1xf32>
    %c0_7 = arith.constant 0 : index
    %c0_8 = arith.constant 0 : index
    %11 = memref.load %arg5[%c0_7, %c0_8] : memref<1x1xf32, #tpu.memory_space<smem>>
    %12 = vector.broadcast %11 : f32 to vector<2x1xf32>
    %13 = arith.addf %10, %12 : vector<2x1xf32>
    %c0_9 = arith.constant 0 : index
    %c0_10 = arith.constant 0 : index
    %14 = vector.load %arg6[%c0_9, %c0_10] : memref<2x1xf32, #tpu.memory_space<vmem>>, vector<2x1xf32>
    tpu.vector_store %arg6[%c0_9, %c0_10], %13 {strides = array<i32>} : memref<2x1xf32, #tpu.memory_space<vmem>>, vector<2x1xf32>,
    return
  }
  func.func @transform_0(%arg0: i32) -> (i32, i32) {
    %c0_i32 = arith.constant 0 : i32
    %c0_i32_0 = arith.constant 0 : i32
    return %arg0, %c0_i32 : i32, i32
  }
  func.func @transform_1(%arg0: i32) -> (i32, i32) {
    %c0_i32 = arith.constant 0 : i32
    %c0_i32_0 = arith.constant 0 : i32
    return %arg0, %c0_i32 : i32, i32
  }
  func.func @transform_2(%arg0: i32) -> (i32, i32) {
    %c0_i32 = arith.constant 0 : i32
    %c0_i32_0 = arith.constant 0 : i32
    %c0_i32_1 = arith.constant 0 : i32
    return %c0_i32, %c0_i32_0 : i32, i32
  }
  func.func @transform_3(%arg0: i32) -> (i32, i32) {
    %c0_i32 = arith.constant 0 : i32
    %c0_i32_0 = arith.constant 0 : i32
    %c0_i32_1 = arith.constant 0 : i32
    return %c0_i32, %c0_i32_0 : i32, i32
  }
  func.func @transform_4(%arg0: i32) -> (i32, i32) {
    %c0_i32 = arith.constant 0 : i32
    %c0_i32_0 = arith.constant 0 : i32
    %c0_i32_1 = arith.constant 0 : i32
    return %c0_i32, %c0_i32_0 : i32, i32
  }
  func.func @transform_5(%arg0: i32) -> (i32, i32) {
    %c0_i32 = arith.constant 0 : i32
    %c0_i32_0 = arith.constant 0 : i32
    return %arg0, %c0_i32 : i32, i32
  }
}

</mosaic_0001>

<llo_original>
// kernel: tpu_custom_call.1
$region0: #{tpu_custom_call.1}
  #allocation0 [shape = 'u32[]', space=smem, size = 0x4, offset = 0x4, fixed_abs, tag = 'smem constant byte address 0x4 - core index']
  #allocation1 [shape = 'u32[144,128]{1,0:T(1,128)}', space=vmem, size = 0x12000, scoped, tag = 'internal scratch']
  #allocation2 [shape = 'f32[1,1]{1,0:T(1,128)S(6)}', space=smem, size = 0x200, scoped, tag = 'scoped memory for tpu_custom_call.1']
  %s0 = inlined_call_operand.hbm [shape: f32[2,2048], index: 0, kind: input, shape index: {}]
  %s1 = inlined_call_operand.hbm [shape: f32[2,2048], index: 1, kind: input, shape index: {}]
  %s2 = inlined_call_operand.hbm [shape: f32[1,2048], index: 2, kind: input, shape index: {}]
  %s3 = inlined_call_operand.hbm [shape: f32[1,2048], index: 3, kind: input, shape index: {}]
  %s4 = inlined_call_operand.<no memory space> [shape: f32[1,1], index: 4, kind: input, shape index: {}]
  %s5 = inlined_call_operand.vmem [shape: f32[2,1], index: 5, kind: output, shape index: {}]
  %s6 = sld [smem:[#allocation0]]
  $region46: #{tpu_custom_call.1} parent=0
    _
  %s8 = ssub.s32 1, %s6
  %s9 = scalar_select 0, %s8, %s6
  %10 = sst [smem:[#allocation2]] %s4
  $region1: #{tpu_custom_call.1} parent=0
    #allocation3 [shape = 'u8[16384]{0}', space=vmem, size = 0x4000, scoped, tag = 'input window, operand 0, single buffered']
    #allocation4 [shape = 's32[1]{0}', space=sflag, size = 0x4, scoped, tag = 'scoped memory for tpu_custom_call.1']
    #allocation5 [shape = 'u8[16384]{0}', space=vmem, size = 0x4000, scoped, tag = 'input window, operand 1, single buffered']
    #allocation6 [shape = 's32[1]{0}', space=sflag, size = 0x4, scoped, tag = 'scoped memory for tpu_custom_call.1']
    #allocation7 [shape = 'u8[8192]{0}', space=vmem, size = 0x2000, scoped, tag = 'input window, operand 2, single buffered']
    #allocation8 [shape = 'u8[8192]{0}', space=vmem, size = 0x2000, scoped, tag = 'input window, operand 3, single buffered']
    #allocation9 [shape = 's32[1]{0}', space=sflag, size = 0x4, scoped, tag = 'scoped memory for tpu_custom_call.1']
    %11 = vsyncpa [#allocation4], 0
    %12 = vsyncpa [#allocation6], 0
    %13 = vsyncpa [#allocation9], 0
    // Predicated region
    $region2: #{tpu_custom_call.1} parent=1 // pred_check
      _
    $region3: #{tpu_custom_call.1} parent=1 // pred_check_branch
      %15 = sbr.rel (0) target = $region5
    $region4: #{tpu_custom_call.1} parent=1 // pred_region
      %s17 = ssub.s32 512, 512
      %18 = vsyncadd [#allocation4], %s17
      %s20 = sshll.u32 [#allocation3], 4
      %s21 = int_to_ptr.vmem [resolvable:$true] %s20
      %23 = dma.hbm_to_vmem [thread:$0]  %s0, 512, %s21, [#allocation4]
    $region5: #{tpu_custom_call.1} parent=1 // pred_fallthru
      _
    // Predicated region
    $region6: #{tpu_custom_call.1} parent=1 // pred_check
      _
    $region7: #{tpu_custom_call.1} parent=1 // pred_check_branch
      %25 = sbr.rel (0) target = $region9
    $region8: #{tpu_custom_call.1} parent=1 // pred_region
      %s27 = ssub.s32 512, 512
      %28 = vsyncadd [#allocation6], %s27
      %s30 = sshll.u32 [#allocation5], 4
      %s31 = int_to_ptr.vmem [resolvable:$true] %s30
      %33 = dma.hbm_to_vmem [thread:$0]  %s1, 512, %s31, [#allocation6]
    $region9: #{tpu_custom_call.1} parent=1 // pred_fallthru
      _
    // Predicated region
    $region10: #{tpu_custom_call.1} parent=1 // pred_check
      _
    $region11: #{tpu_custom_call.1} parent=1 // pred_check_branch
      %35 = sbr.rel (0) target = $region13
    $region12: #{tpu_custom_call.1} parent=1 // pred_region
      %s37 = ssub.s32 256, 256
      %38 = vsyncadd [#allocation6], %s37
      %s40 = sshll.u32 [#allocation7], 4
      %s41 = int_to_ptr.vmem [resolvable:$true] %s40
      %43 = dma.hbm_to_vmem [thread:$0]  %s2, 256, %s41, [#allocation6]
    $region13: #{tpu_custom_call.1} parent=1 // pred_fallthru
      _
    // Predicated region
    $region14: #{tpu_custom_call.1} parent=1 // pred_check
      _
    $region15: #{tpu_custom_call.1} parent=1 // pred_check_branch
      %45 = sbr.rel (0) target = $region17
    $region16: #{tpu_custom_call.1} parent=1 // pred_region
      %s47 = ssub.s32 256, 256
      %48 = vsyncadd [#allocation9], %s47
      %s50 = sshll.u32 [#allocation8], 4
      %s51 = int_to_ptr.vmem [resolvable:$true] %s50
      %53 = dma.hbm_to_vmem [thread:$0]  %s3, 256, %s51, [#allocation9]
    $region17: #{tpu_custom_call.1} parent=1 // pred_fallthru
      _
    // Predicated region
    $region18: #{tpu_custom_call.1} parent=1 // pred_check
      _
    $region19: #{tpu_custom_call.1} parent=1 // pred_check_branch
      %55 = sbr.rel (0) target = $region21
    $region20: #{tpu_custom_call.1} parent=1 // pred_region
      _
    $region21: #{tpu_custom_call.1} parent=1 // pred_fallthru
      _
    // Predicated region
    $region22: #{tpu_custom_call.1} parent=1 // pred_check
      _
    $region23: #{tpu_custom_call.1} parent=1 // pred_check_branch
      %57 = sbr.rel (0) target = $region25
    $region24: #{tpu_custom_call.1} parent=1 // pred_region
      %58 = dma.done [#allocation4], 512
    $region25: #{tpu_custom_call.1} parent=1 // pred_fallthru
      _
    // Predicated region
    $region26: #{tpu_custom_call.1} parent=1 // pred_check
      _
    $region27: #{tpu_custom_call.1} parent=1 // pred_check_branch
      %60 = sbr.rel (0) target = $region29
    $region28: #{tpu_custom_call.1} parent=1 // pred_region
      %61 = dma.done [#allocation6], 512
    $region29: #{tpu_custom_call.1} parent=1 // pred_fallthru
      _
    // Predicated region
    $region30: #{tpu_custom_call.1} parent=1 // pred_check
      _
    $region31: #{tpu_custom_call.1} parent=1 // pred_check_branch
      %63 = sbr.rel (0) target = $region33
    $region32: #{tpu_custom_call.1} parent=1 // pred_region
      %64 = dma.done [#allocation6], 256
    $region33: #{tpu_custom_call.1} parent=1 // pred_fallthru
      _
    // Predicated region
    $region34: #{tpu_custom_call.1} parent=1 // pred_check
      _
    $region35: #{tpu_custom_call.1} parent=1 // pred_check_branch
      %66 = sbr.rel (0) target = $region37
    $region36: #{tpu_custom_call.1} parent=1 // pred_region
      %67 = dma.done [#allocation9], 256
    $region37: #{tpu_custom_call.1} parent=1 // pred_fallthru
      _
    %v68 = vld [vmem:[#allocation3] sm:$0xff]
    %v69 = vld [vmem:[#allocation3 + $0x8] sm:$0xff]
    %v70 = vld [vmem:[#allocation3 + $0x10] sm:$0xff]
    %v71 = vld [vmem:[#allocation3 + $0x18] sm:$0xff]
    %v72 = vld [vmem:[#allocation5] sm:$0xff]
    %v73 = vld [vmem:[#allocation5 + $0x8] sm:$0xff]
    %v74 = vld [vmem:[#allocation5 + $0x10] sm:$0xff]
    %v75 = vld [vmem:[#allocation5 + $0x18] sm:$0xff]
    %v76 = vld [vmem:[#allocation7] sm:$0xff]
    %v77 = vld [vmem:[#allocation7 + $0x8] sm:$0xff]
    %v78 = vld [vmem:[#allocation8] sm:$0xff]
    %v79 = vld [vmem:[#allocation8 + $0x8] sm:$0xff]
    %v82 = vlaneseq
    %v83 = vshrl.u32 %v82, 7
    %v84 = vsub.s32 0, %v83
    %v85 = vrot.slane %v76, %v84
    %v86 = vlaneseq
    %v87 = vshrl.u32 %v86, 7
    %v88 = vsub.s32 1, %v87
    %v89 = vrot.slane %v76, %v88
    %v90 = vlaneseq
    %v91 = vshrl.u32 %v90, 7
    %v92 = vsub.s32 2, %v91
    %v93 = vrot.slane %v76, %v92
    %v94 = vlaneseq
    %v95 = vshrl.u32 %v94, 7
    %v96 = vsub.s32 3, %v95
    %v97 = vrot.slane %v76, %v96
    %v98 = vlaneseq
    %v99 = vshrl.u32 %v98, 7
    %v100 = vsub.s32 4, %v99
    %v101 = vrot.slane %v76, %v100
    %v102 = vlaneseq
    %v103 = vshrl.u32 %v102, 7
    %v104 = vsub.s32 5, %v103
    %v105 = vrot.slane %v76, %v104
    %v106 = vlaneseq
    %v107 = vshrl.u32 %v106, 7
    %v108 = vsub.s32 6, %v107
    %v109 = vrot.slane %v76, %v108
    %v110 = vlaneseq
    %v111 = vshrl.u32 %v110, 7
    %v112 = vsub.s32 7, %v111
    %v113 = vrot.slane %v76, %v112
    %v114 = vlaneseq
    %v115 = vshrl.u32 %v114, 7
    %v116 = vsub.s32 0, %v115
    %v117 = vrot.slane %v77, %v116
    %v118 = vlaneseq
    %v119 = vshrl.u32 %v118, 7
    %v120 = vsub.s32 1, %v119
    %v121 = vrot.slane %v77, %v120
    %v122 = vlaneseq
    %v123 = vshrl.u32 %v122, 7
    %v124 = vsub.s32 2, %v123
    %v125 = vrot.slane %v77, %v124
    %v126 = vlaneseq
    %v127 = vshrl.u32 %v126, 7
    %v128 = vsub.s32 3, %v127
    %v129 = vrot.slane %v77, %v128
    %v130 = vlaneseq
    %v131 = vshrl.u32 %v130, 7
    %v132 = vsub.s32 4, %v131
    %v133 = vrot.slane %v77, %v132
    %v134 = vlaneseq
    %v135 = vshrl.u32 %v134, 7
    %v136 = vsub.s32 5, %v135
    %v137 = vrot.slane %v77, %v136
    %v138 = vlaneseq
    %v139 = vshrl.u32 %v138, 7
    %v140 = vsub.s32 6, %v139
    %v141 = vrot.slane %v77, %v140
    %v142 = vlaneseq
    %v143 = vshrl.u32 %v142, 7
    %v144 = vsub.s32 7, %v143
    %v145 = vrot.slane %v77, %v144
    %v146 = vcombine.low %v85, %v89
    %v147 = vcombine.low %v93, %v97
    %v149 = vunpack.c.l.s4 1983009808
    %v150 = vunpack.c.0.s8 %v149
    %v151 = vlaneseq
    %v152 = vshrl.u32 %v151, 7
    %v153 = vsub.s32 %v150, %v152
    %v154 = vrot.slane %v146, %v153
    %v156 = vunpack.c.l.s4 1983009808
    %v157 = vunpack.c.0.s8 %v156
    %v158 = vlaneseq
    %v159 = vshrl.u32 %v158, 7
    %v160 = vsub.s32 %v157, %v159
    %v161 = vrot.slane %v147, %v160
    %v162 = vcombine.low %v154, %v161
    %v163 = vcombine.low %v101, %v105
    %v164 = vcombine.low %v109, %v113
    %v166 = vunpack.c.l.s4 1983009808
    %v167 = vunpack.c.0.s8 %v166
    %v168 = vlaneseq
    %v169 = vshrl.u32 %v168, 7
    %v170 = vsub.s32 %v167, %v169
    %v171 = vrot.slane %v163, %v170
    %v173 = vunpack.c.l.s4 1983009808
    %v174 = vunpack.c.0.s8 %v173
    %v175 = vlaneseq
    %v176 = vshrl.u32 %v175, 7
    %v177 = vsub.s32 %v174, %v176
    %v178 = vrot.slane %v164, %v177
    %v179 = vcombine.low %v171, %v178
    %v180 = vcombine.low %v117, %v121
    %v181 = vcombine.low %v125, %v129
    %v183 = vunpack.c.l.s4 1983009808
    %v184 = vunpack.c.0.s8 %v183
    %v185 = vlaneseq
    %v186 = vshrl.u32 %v185, 7
    %v187 = vsub.s32 %v184, %v186
    %v188 = vrot.slane %v180, %v187
    %v190 = vunpack.c.l.s4 1983009808
    %v191 = vunpack.c.0.s8 %v190
    %v192 = vlaneseq
    %v193 = vshrl.u32 %v192, 7
    %v194 = vsub.s32 %v191, %v193
    %v195 = vrot.slane %v181, %v194
    %v196 = vcombine.low %v188, %v195
    %v197 = vcombine.low %v133, %v137
    %v198 = vcombine.low %v141, %v145
    %v200 = vunpack.c.l.s4 1983009808
    %v201 = vunpack.c.0.s8 %v200
    %v202 = vlaneseq
    %v203 = vshrl.u32 %v202, 7
    %v204 = vsub.s32 %v201, %v203
    %v205 = vrot.slane %v197, %v204
    %v207 = vunpack.c.l.s4 1983009808
    %v208 = vunpack.c.0.s8 %v207
    %v209 = vlaneseq
    %v210 = vshrl.u32 %v209, 7
    %v211 = vsub.s32 %v208, %v210
    %v212 = vrot.slane %v198, %v211
    %v213 = vcombine.low %v205, %v212
    %v218 = vmul.f32 %v68, %v162
    %v219 = vmul.f32 %v69, %v179
    %v220 = vmul.f32 %v70, %v196
    %v221 = vmul.f32 %v71, %v213
    %v224 = vlaneseq
    %v225 = vshrl.u32 %v224, 7
    %v226 = vsub.s32 0, %v225
    %v227 = vrot.slane %v78, %v226
    %v228 = vlaneseq
    %v229 = vshrl.u32 %v228, 7
    %v230 = vsub.s32 1, %v229
    %v231 = vrot.slane %v78, %v230
    %v232 = vlaneseq
    %v233 = vshrl.u32 %v232, 7
    %v234 = vsub.s32 2, %v233
    %v235 = vrot.slane %v78, %v234
    %v236 = vlaneseq
    %v237 = vshrl.u32 %v236, 7
    %v238 = vsub.s32 3, %v237
    %v239 = vrot.slane %v78, %v238
    %v240 = vlaneseq
    %v241 = vshrl.u32 %v240, 7
    %v242 = vsub.s32 4, %v241
    %v243 = vrot.slane %v78, %v242
    %v244 = vlaneseq
    %v245 = vshrl.u32 %v244, 7
    %v246 = vsub.s32 5, %v245
    %v247 = vrot.slane %v78, %v246
    %v248 = vlaneseq
    %v249 = vshrl.u32 %v248, 7
    %v250 = vsub.s32 6, %v249
    %v251 = vrot.slane %v78, %v250
    %v252 = vlaneseq
    %v253 = vshrl.u32 %v252, 7
    %v254 = vsub.s32 7, %v253
    %v255 = vrot.slane %v78, %v254
    %v256 = vlaneseq
    %v257 = vshrl.u32 %v256, 7
    %v258 = vsub.s32 0, %v257
    %v259 = vrot.slane %v79, %v258
    %v260 = vlaneseq
    %v261 = vshrl.u32 %v260, 7
    %v262 = vsub.s32 1, %v261
    %v263 = vrot.slane %v79, %v262
    %v264 = vlaneseq
    %v265 = vshrl.u32 %v264, 7
    %v266 = vsub.s32 2, %v265
    %v267 = vrot.slane %v79, %v266
    %v268 = vlaneseq
    %v269 = vshrl.u32 %v268, 7
    %v270 = vsub.s32 3, %v269
    %v271 = vrot.slane %v79, %v270
    %v272 = vlaneseq
    %v273 = vshrl.u32 %v272, 7
    %v274 = vsub.s32 4, %v273
    %v275 = vrot.slane %v79, %v274
    %v276 = vlaneseq
    %v277 = vshrl.u32 %v276, 7
    %v278 = vsub.s32 5, %v277
    %v279 = vrot.slane %v79, %v278
    %v280 = vlaneseq
    %v281 = vshrl.u32 %v280, 7
    %v282 = vsub.s32 6, %v281
    %v283 = vrot.slane %v79, %v282
    %v284 = vlaneseq
    %v285 = vshrl.u32 %v284, 7
    %v286 = vsub.s32 7, %v285
    %v287 = vrot.slane %v79, %v286
    %v288 = vcombine.low %v227, %v231
    %v289 = vcombine.low %v235, %v239
    %v291 = vunpack.c.l.s4 1983009808
    %v292 = vunpack.c.0.s8 %v291
    %v293 = vlaneseq
    %v294 = vshrl.u32 %v293, 7
    %v295 = vsub.s32 %v292, %v294
    %v296 = vrot.slane %v288, %v295
    %v298 = vunpack.c.l.s4 1983009808
    %v299 = vunpack.c.0.s8 %v298
    %v300 = vlaneseq
    %v301 = vshrl.u32 %v300, 7
    %v302 = vsub.s32 %v299, %v301
    %v303 = vrot.slane %v289, %v302
    %v304 = vcombine.low %v296, %v303
    %v305 = vcombine.low %v243, %v247
    %v306 = vcombine.low %v251, %v255
    %v308 = vunpack.c.l.s4 1983009808
    %v309 = vunpack.c.0.s8 %v308
    %v310 = vlaneseq
    %v311 = vshrl.u32 %v310, 7
    %v312 = vsub.s32 %v309, %v311
    %v313 = vrot.slane %v305, %v312
    %v315 = vunpack.c.l.s4 1983009808
    %v316 = vunpack.c.0.s8 %v315
    %v317 = vlaneseq
    %v318 = vshrl.u32 %v317, 7
    %v319 = vsub.s32 %v316, %v318
    %v320 = vrot.slane %v306, %v319
    %v321 = vcombine.low %v313, %v320
    %v322 = vcombine.low %v259, %v263
    %v323 = vcombine.low %v267, %v271
    %v325 = vunpack.c.l.s4 1983009808
    %v326 = vunpack.c.0.s8 %v325
    %v327 = vlaneseq
    %v328 = vshrl.u32 %v327, 7
    %v329 = vsub.s32 %v326, %v328
    %v330 = vrot.slane %v322, %v329
    %v332 = vunpack.c.l.s4 1983009808
    %v333 = vunpack.c.0.s8 %v332
    %v334 = vlaneseq
    %v335 = vshrl.u32 %v334, 7
    %v336 = vsub.s32 %v333, %v335
    %v337 = vrot.slane %v323, %v336
    %v338 = vcombine.low %v330, %v337
    %v339 = vcombine.low %v275, %v279
    %v340 = vcombine.low %v283, %v287
    %v342 = vunpack.c.l.s4 1983009808
    %v343 = vunpack.c.0.s8 %v342
    %v344 = vlaneseq
    %v345 = vshrl.u32 %v344, 7
    %v346 = vsub.s32 %v343, %v345
    %v347 = vrot.slane %v339, %v346
    %v349 = vunpack.c.l.s4 1983009808
    %v350 = vunpack.c.0.s8 %v349
    %v351 = vlaneseq
    %v352 = vshrl.u32 %v351, 7
    %v353 = vsub.s32 %v350, %v352
    %v354 = vrot.slane %v340, %v353
    %v355 = vcombine.low %v347, %v354
    %v360 = vmul.f32 %v72, %v304
    %v361 = vmul.f32 %v73, %v321
    %v362 = vmul.f32 %v74, %v338
    %v363 = vmul.f32 %v75, %v355
    %v364 = vadd.f32 %v218, %v360
    %v365 = vadd.f32 %v219, %v361
    %v366 = vadd.f32 %v220, %v362
    %v367 = vadd.f32 %v221, %v363
    %v372 = vcombine.high %v364, %v364
    %v374 = vunpack.c.l.s4 1983009808
    %v375 = vunpack.c.0.s8 %v374
    %v376 = vlaneseq
    %v377 = vshrl.u32 %v376, 7
    %v378 = vsub.s32 %v375, %v377
    %v379 = vrot.slane %v364, %v378
    %v381 = vunpack.c.l.s4 1983009808
    %v382 = vunpack.c.0.s8 %v381
    %v383 = vlaneseq
    %v384 = vshrl.u32 %v383, 7
    %v385 = vsub.s32 %v382, %v384
    %v386 = vrot.slane %v372, %v385
    %v387 = vcombine.high %v379, %v379
    %v388 = vcombine.high %v386, %v386
    %v389 = vcombine.high %v365, %v365
    %v391 = vunpack.c.l.s4 1983009808
    %v392 = vunpack.c.0.s8 %v391
    %v393 = vlaneseq
    %v394 = vshrl.u32 %v393, 7
    %v395 = vsub.s32 %v392, %v394
    %v396 = vrot.slane %v365, %v395
    %v398 = vunpack.c.l.s4 1983009808
    %v399 = vunpack.c.0.s8 %v398
    %v400 = vlaneseq
    %v401 = vshrl.u32 %v400, 7
    %v402 = vsub.s32 %v399, %v401
    %v403 = vrot.slane %v389, %v402
    %v404 = vcombine.high %v396, %v396
    %v405 = vcombine.high %v403, %v403
    %v406 = vcombine.high %v366, %v366
    %v408 = vunpack.c.l.s4 1983009808
    %v409 = vunpack.c.0.s8 %v408
    %v410 = vlaneseq
    %v411 = vshrl.u32 %v410, 7
    %v412 = vsub.s32 %v409, %v411
    %v413 = vrot.slane %v366, %v412
    %v415 = vunpack.c.l.s4 1983009808
    %v416 = vunpack.c.0.s8 %v415
    %v417 = vlaneseq
    %v418 = vshrl.u32 %v417, 7
    %v419 = vsub.s32 %v416, %v418
    %v420 = vrot.slane %v406, %v419
    %v421 = vcombine.high %v413, %v413
    %v422 = vcombine.high %v420, %v420
    %v423 = vcombine.high %v367, %v367
    %v425 = vunpack.c.l.s4 1983009808
    %v426 = vunpack.c.0.s8 %v425
    %v427 = vlaneseq
    %v428 = vshrl.u32 %v427, 7
    %v429 = vsub.s32 %v426, %v428
    %v430 = vrot.slane %v367, %v429
    %v432 = vunpack.c.l.s4 1983009808
    %v433 = vunpack.c.0.s8 %v432
    %v434 = vlaneseq
    %v435 = vshrl.u32 %v434, 7
    %v436 = vsub.s32 %v433, %v435
    %v437 = vrot.slane %v423, %v436
    %v438 = vcombine.high %v430, %v430
    %v439 = vcombine.high %v437, %v437
    %vm456 = vcmask 1041408
    %v457 = vsel %vm456, %v379, 0.0
    %v458 = vsel %vm456, %v387, 0.0
    %v459 = vadd.f32 %v457, %v458
    %v460 = vsel %vm456, %v386, 0.0
    %v461 = vadd.f32 %v459, %v460
    %v462 = vsel %vm456, %v388, 0.0
    %v463 = vadd.f32 %v461, %v462
    %v464 = vsel %vm456, %v396, 0.0
    %v465 = vadd.f32 %v463, %v464
    %v466 = vsel %vm456, %v404, 0.0
    %v467 = vadd.f32 %v465, %v466
    %v468 = vsel %vm456, %v403, 0.0
    %v469 = vadd.f32 %v467, %v468
    %v470 = vsel %vm456, %v405, 0.0
    %v471 = vadd.f32 %v469, %v470
    %v472 = vsel %vm456, %v413, 0.0
    %v473 = vadd.f32 %v471, %v472
    %v474 = vsel %vm456, %v421, 0.0
    %v475 = vadd.f32 %v473, %v474
    %v476 = vsel %vm456, %v420, 0.0
    %v477 = vadd.f32 %v475, %v476
    %v478 = vsel %vm456, %v422, 0.0
    %v479 = vadd.f32 %v477, %v478
    %v480 = vsel %vm456, %v430, 0.0
    %v481 = vadd.f32 %v479, %v480
    %v482 = vsel %vm456, %v438, 0.0
    %v483 = vadd.f32 %v481, %v482
    %v484 = vsel %vm456, %v437, 0.0
    %v485 = vadd.f32 %v483, %v484
    %v486 = vsel %vm456, %v439, 0.0
    %v487 = vadd.f32 %v485, %v486
    %488 = vadd.xlane.f32.xlu0 %v487
    %v489 = vpop.xlane.xlu0 %488
    %s490 = sld [smem:[#allocation2]]
    %v491 = vstv %s490
    %v492 = vadd.f32 %v489, %v491
    %vm493 = vcmask 1024
    %494 = vst.msk [vmem:[%s5] sm:$0x3] %vm493, %v492
    // Predicated region
    $region38: #{tpu_custom_call.1} parent=1 // pred_check
      _
    $region39: #{tpu_custom_call.1} parent=1 // pred_check_branch
      %496 = sbr.rel (0) target = $region41
    $region40: #{tpu_custom_call.1} parent=1 // pred_region
      _
    $region41: #{tpu_custom_call.1} parent=1 // pred_fallthru
      _
    // Predicated region
    $region42: #{tpu_custom_call.1} parent=1 // pred_check
      _
    $region43: #{tpu_custom_call.1} parent=1 // pred_check_branch
      %498 = sbr.rel (0) target = $region45
    $region44: #{tpu_custom_call.1} parent=1 // pred_region
      _
    $region45: #{tpu_custom_call.1} parent=1 // pred_fallthru
      _
    %499 = vsyncpa [#allocation4], 1
    %500 = vsyncpa [#allocation6], 1
    %501 = vsyncpa [#allocation9], 1

</llo_original>
